<compile_context>
chip_gen: v6e
topology: v6e:2x2x1
jax: 0.10.0
libtpu: 0.0.40
codegen_flags: <defaults>
</compile_context>

<pallas_src>
import jax
import jax.numpy as jnp
from jax.experimental import pallas as pl
from jax.experimental.pallas import tpu as pltpu


LANES = 128               # vreg lane width
SUBLANES = 8              # f32 vreg sublane height
MAX_BLOCK_ROWS = 8192     # 8192 rows * 128 lanes * 4 B = 4 MiB per f32 tile
VMEM_LIMIT = 32 * 1024 * 1024


def _round_up(v, m):
    return ((v + m - 1) // m) * m


def _num_tensorcores():
    """2 on dual-TensorCore chips (v7x / v4 / v5p megacore), else 1."""
    try:
        kind = jax.devices()[0].device_kind.lower()
    except Exception:
        return 1
    if any(s in kind for s in ("v5 lite", "v5e", "v5litepod", "v6 lite", "v6e")):
        return 1
    if any(s in kind for s in ("v7", "7x", "v4", "v5p")):
        return 2
    return 1


def _to_slab(x):
    """View x as a lane-dense (rows, 128) slab in its native dtype.

    Zero-copy (ravel + reshape of a contiguous array) when numel % 128 == 0.
    Ragged sizes fall back to a small zero-pad; the padded zeros are summed
    harmlessly because the mean divides by the TRUE element count."""
    flat = jnp.ravel(x)
    n = flat.shape[0]
    rows = pl.cdiv(n, LANES)
    pad = rows * LANES - n
    if pad:
        flat = jnp.pad(flat, (0, pad))
    return flat.reshape(rows, LANES), rows


# --------------------------------------------------------------------------
# Shared per-block accumulate: (blk,128) tile -> per-lane (8,128) partial sum.
# --------------------------------------------------------------------------
def _accumulate_block(pool_ref, conv_ref, acc_pool, acc_conv, start_row, *,
                      blk, rows_pool, rows_conv, pool_mask, conv_mask):
    """Add this block's per-lane partial sums into the (8,128) accumulators.

    Full blocks take an unmasked fast path (pure vld+vadd); only blocks that
    overlap (or lie past) an input's tail are masked against the true row
    count, so clamped / over-covering blocks contribute exactly zero."""

    def accum(masked):
        def body():
            pool = pool_ref[...].astype(jnp.float32)
            conv = conv_ref[...].astype(jnp.float32)
            if masked:
                row_ids = start_row + jax.lax.broadcasted_iota(
                    jnp.int32, (blk, LANES), 0)
                if pool_mask:
                    pool = jnp.where(row_ids < rows_pool, pool, 0.0)
                if conv_mask:
                    conv = jnp.where(row_ids < rows_conv, conv, 0.0)
            # (blk,128) -> (blk//8, 8, 128) -> sum over axis 0: sublane-aligned
            # vreg adds only; the single cross-lane reduce happens once at the end.
            acc_pool[...] += jnp.sum(
                pool.reshape(blk // SUBLANES, SUBLANES, LANES), axis=0)
            acc_conv[...] += jnp.sum(
                conv.reshape(blk // SUBLANES, SUBLANES, LANES), axis=0)
        return body

    if not (pool_mask or conv_mask):
        accum(False)()
        return

    end_row = start_row + blk
    preds = []
    if pool_mask:
        preds.append(end_row > rows_pool)
    if conv_mask:
        preds.append(end_row > rows_conv)
    partial = preds[0]
    for pr in preds[1:]:
        partial = jnp.logical_or(partial, pr)

    pl.when(partial)(accum(True))
    pl.when(jnp.logical_not(partial))(accum(False))


# --------------------------------------------------------------------------
# Single-TensorCore kernel (v5e / v6e): reduction + fused epilogue.
# --------------------------------------------------------------------------
def _make_fused_kernel(*, blk, rows_pool, rows_conv, pool_mask, conv_mask,
                       inv_n_pool, inv_n_conv):
    def kernel(scal_ref, pool_ref, conv_ref, out_ref, acc_pool, acc_conv):
        step = pl.program_id(0)

        @pl.when(step == 0)
        def _init():
            acc_pool[...] = jnp.zeros_like(acc_pool)
            acc_conv[...] = jnp.zeros_like(acc_conv)

        _accumulate_block(pool_ref, conv_ref, acc_pool, acc_conv, step * blk,
                          blk=blk, rows_pool=rows_pool, rows_conv=rows_conv,
                          pool_mask=pool_mask, conv_mask=conv_mask)

        @pl.when(step == pl.num_programs(0) - 1)
        def _finalize():
            # Single (8,128) -> (1,1) reduce, done exactly once.
            pool_sum = jnp.sum(jnp.sum(acc_pool[...], axis=0, keepdims=True),
                               axis=1, keepdims=True)
            conv_sum = jnp.sum(jnp.sum(acc_conv[...], axis=0, keepdims=True),
                               axis=1, keepdims=True)
            # scal_ref (SMEM, f32[2]): [prob_param, uniform u]
            logit = scal_ref[0] + pool_sum * inv_n_pool - conv_sum * inv_n_conv
            p = jax.nn.sigmoid(logit)                                # (1,1)
            out_ref[...] = (scal_ref[1] < p).astype(jnp.float32)     # Bernoulli(p)
    return kernel


# --------------------------------------------------------------------------
# Dual-TensorCore kernel (v7x megacore): per-core (8,128) partial sums,
# accumulated directly into the resident output blocks.
# --------------------------------------------------------------------------
def _make_partials_kernel(*, blk, rows_pool, rows_conv, pool_mask, conv_mask):
    def kernel(pool_ref, conv_ref, out_pool_ref, out_conv_ref):
        core = pl.program_id(0)
        step = pl.program_id(1)

        @pl.when(step == 0)
        def _init():
            out_pool_ref[...] = jnp.zeros_like(out_pool_ref)
            out_conv_ref[...] = jnp.zeros_like(out_conv_ref)

        start_row = (core * pl.num_programs(1) + step) * blk
        _accumulate_block(pool_ref, conv_ref, out_pool_ref, out_conv_ref,
                          start_row, blk=blk, rows_pool=rows_pool,
                          rows_conv=rows_conv, pool_mask=pool_mask,
                          conv_mask=conv_mask)
    return kernel


# --------------------------------------------------------------------------
# Wrapper
# --------------------------------------------------------------------------
def reinforce_decision_maker(t_flex_pool, t_flex_conv, prob_param, seed):
    """JAX/Pallas equivalent of REINFORCEDecisionMaker.forward."""
    # Bernoulli uniform drawn with jax.random (deterministic for a given seed).
    u = jax.random.uniform(jax.random.PRNGKey(seed), (), dtype=jnp.float32)
    prob_scalar = jnp.reshape(prob_param, ()).astype(jnp.float32)

    n_pool = int(t_flex_pool.size)
    n_conv = int(t_flex_conv.size)

    pool2d, rows_pool = _to_slab(t_flex_pool)
    conv2d, rows_conv = _to_slab(t_flex_conv)

    num_cores = _num_tensorcores()
    rows_max = max(rows_pool, rows_conv)

    # Biggest lane-dense tile within budget; multiple of 16 rows so packed
    # sub-32-bit inputs (bf16) stay sublane-aligned too.
    blk = min(MAX_BLOCK_ROWS, _round_up(pl.cdiv(rows_max, num_cores), 16))
    steps = pl.cdiv(rows_max, blk * num_cores)
    total_rows = num_cores * steps * blk

    # Static tail analysis: mask an input only if the grid over-covers it.
    pool_mask = total_rows > rows_pool
    conv_mask = total_rows > rows_conv

    # Clamp block indices for over-covered inputs (clamped blocks are fully
    # masked to zero in-kernel, so re-reading the last block is safe).
    last_pool = max(pl.cdiv(rows_pool, blk) - 1, 0)
    last_conv = max(pl.cdiv(rows_conv, blk) - 1, 0)

    if num_cores == 1:
        pool_map = lambda i: (jnp.minimum(i, last_pool), 0)
        conv_map = lambda i: (jnp.minimum(i, last_conv), 0)
        kernel = _make_fused_kernel(
            blk=blk, rows_pool=rows_pool, rows_conv=rows_conv,
            pool_mask=pool_mask, conv_mask=conv_mask,
            inv_n_pool=1.0 / n_pool, inv_n_conv=1.0 / n_conv)
        scalars = jnp.stack([prob_scalar, u])
        out = pl.pallas_call(
            kernel,
            out_shape=jax.ShapeDtypeStruct((1, 1), jnp.float32),
            grid=(steps,),
            in_specs=[
                pl.BlockSpec(memory_space=pltpu.MemorySpace.SMEM),  # [prob, u]
                pl.BlockSpec((blk, LANES), pool_map),
                pl.BlockSpec((blk, LANES), conv_map),
            ],
            out_specs=pl.BlockSpec((1, 1), lambda i: (0, 0)),
            scratch_shapes=[
                pltpu.VMEM((SUBLANES, LANES), jnp.float32),
                pltpu.VMEM((SUBLANES, LANES), jnp.float32),
            ],
            compiler_params=pltpu.CompilerParams(
                dimension_semantics=("arbitrary",),
                vmem_limit_bytes=VMEM_LIMIT),
        )(scalars, pool2d, conv2d)
        return out.reshape(1, 1, 1, 1)

    # Dual-TensorCore path: each core reduces half the rows into its own
    # (8,128) partial; the trivial 2x8x128 combine + sigmoid + Bernoulli
    # compare runs in plain jnp (no second pallas_call).
    pool_map = lambda c, i: (jnp.minimum(c * steps + i, last_pool), 0)
    conv_map = lambda c, i: (jnp.minimum(c * steps + i, last_conv), 0)
    kernel = _make_partials_kernel(
        blk=blk, rows_pool=rows_pool, rows_conv=rows_conv,
        pool_mask=pool_mask, conv_mask=conv_mask)
    part_shape = jax.ShapeDtypeStruct((num_cores, SUBLANES, LANES), jnp.float32)
    pool_part, conv_part = pl.pallas_call(
        kernel,
        out_shape=(part_shape, part_shape),
        grid=(num_cores, steps),
        in_specs=[
            pl.BlockSpec((blk, LANES), pool_map),
            pl.BlockSpec((blk, LANES), conv_map),
        ],
        out_specs=(
            pl.BlockSpec((None, SUBLANES, LANES), lambda c, i: (c, 0, 0)),
            pl.BlockSpec((None, SUBLANES, LANES), lambda c, i: (c, 0, 0)),
        ),
        compiler_params=pltpu.CompilerParams(
            dimension_semantics=("parallel", "arbitrary"),
            vmem_limit_bytes=VMEM_LIMIT),
    )(pool2d, conv2d)

    logit = (prob_scalar + jnp.sum(pool_part) / n_pool
             - jnp.sum(conv_part) / n_conv)
    p = jax.nn.sigmoid(logit)
    return (u < p).astype(jnp.float32).reshape(1, 1, 1, 1)


if __name__ == "__main__":
    key = jax.random.PRNGKey(0)
    k_pool, k_conv = jax.random.split(key)

    # Small NCHW-style inputs consistent with the module.
    t_flex_pool = jax.random.normal(k_pool, (2, 4, 16, 16), dtype=jnp.float32)
    t_flex_conv = jax.random.normal(k_conv, (2, 4, 16, 16), dtype=jnp.float32)

    # Deterministic parameter init, exactly as in __init__: ones(1,1,1,1) * 0.5
    prob_param = jnp.ones((1, 1, 1, 1), dtype=jnp.float32) * 0.5

    sample = reinforce_decision_maker(t_flex_pool, t_flex_conv, prob_param, seed=0)
    sample = jax.block_until_ready(sample)

    assert sample.shape == (1, 1, 1, 1)
    assert sample.dtype == jnp.float32
    v = float(sample[0, 0, 0, 0])
    assert v in (0.0, 1.0), f"bernoulli sample must be 0 or 1, got {v}"

    print("KERNEL_OK")
</pallas_src>

<mosaic_0001>
module attributes {stable_mosaic.version = 11 : i64} {
  func.func @kernel(%arg0: i32, %arg1: memref<2xf32, #tpu.memory_space<smem>>, %arg2: memref<16x128xf32, #tpu.memory_space<vmem>>, %arg3: memref<16x128xf32, #tpu.memory_space<vmem>>, %arg4: memref<1x1xf32, #tpu.memory_space<vmem>>, %arg5: memref<8x128xf32, #tpu.memory_space<vmem>>, %arg6: memref<8x128xf32, #tpu.memory_space<vmem>>) attributes {dimension_semantics = [#tpu.dimension_semantics<arbitrary>], iteration_bounds = array<i64: 1>, scalar_prefetch = 0 : i64, scratch_operands = 2 : i64, tpu.core_type = #tpu.core_type<tc>, window_params = [{transform_indices = @transform_0, window_bounds = array<i64: 2>}, {transform_indices = @transform_1, window_bounds = array<i64: 16, 128>}, {transform_indices = @transform_2, window_bounds = array<i64: 16, 128>}, {pipeline_mode = #tpu.pipeline_mode<synchronous>, transform_indices = @transform_3, window_bounds = array<i64: 1, 1>}]} {
    %c0_i32 = arith.constant 0 : i32
    %0 = arith.cmpi eq, %arg0, %c0_i32 : i32
    %1 = arith.extui %0 : i1 to i32
    %c0_i32_0 = arith.constant 0 : i32
    %2 = arith.cmpi ne, %1, %c0_i32_0 : i32
    scf.if %2 {
      %cst_15 = arith.constant 0.000000e+00 : f32
      %18 = vector.broadcast %cst_15 : f32 to vector<8x128xf32>
      %c0_16 = arith.constant 0 : index
      %c0_17 = arith.constant 0 : index
      %19 = vector.load %arg5[%c0_16, %c0_17] : memref<8x128xf32, #tpu.memory_space<vmem>>, vector<8x128xf32>
      tpu.vector_store %arg5[%c0_16, %c0_17], %18 {strides = array<i32>} : memref<8x128xf32, #tpu.memory_space<vmem>>, vector<8x128xf32>,
      %cst_18 = arith.constant 0.000000e+00 : f32
      %20 = vector.broadcast %cst_18 : f32 to vector<8x128xf32>
      %c0_19 = arith.constant 0 : index
      %c0_20 = arith.constant 0 : index
      %21 = vector.load %arg6[%c0_19, %c0_20] : memref<8x128xf32, #tpu.memory_space<vmem>>, vector<8x128xf32>
      tpu.vector_store %arg6[%c0_19, %c0_20], %20 {strides = array<i32>} : memref<8x128xf32, #tpu.memory_space<vmem>>, vector<8x128xf32>,
    } else {
    }
    %c0 = arith.constant 0 : index
    %c0_1 = arith.constant 0 : index
    %3 = vector.load %arg2[%c0, %c0_1] : memref<16x128xf32, #tpu.memory_space<vmem>>, vector<16x128xf32>
    %c0_2 = arith.constant 0 : index
    %c0_3 = arith.constant 0 : index
    %4 = vector.load %arg3[%c0_2, %c0_3] : memref<16x128xf32, #tpu.memory_space<vmem>>, vector<16x128xf32>
    %c0_4 = arith.constant 0 : index
    %c0_5 = arith.constant 0 : index
    %5 = vector.load %arg5[%c0_4, %c0_5] : memref<8x128xf32, #tpu.memory_space<vmem>>, vector<8x128xf32>
    %6 = vector.shape_cast %3 : vector<16x128xf32> to vector<2x8x128xf32>
    %cst = arith.constant dense<0.000000e+00> : vector<8x128xf32>
    %7 = vector.multi_reduction <add>, %6, %cst [0] : vector<2x8x128xf32> to vector<8x128xf32>
    %8 = arith.addf %5, %7 : vector<8x128xf32>
    %c0_6 = arith.constant 0 : index
    %c0_7 = arith.constant 0 : index
    %9 = vector.load %arg5[%c0_6, %c0_7] : memref<8x128xf32, #tpu.memory_space<vmem>>, vector<8x128xf32>
    tpu.vector_store %arg5[%c0_6, %c0_7], %8 {strides = array<i32>} : memref<8x128xf32, #tpu.memory_space<vmem>>, vector<8x128xf32>,
    %c0_8 = arith.constant 0 : index
    %c0_9 = arith.constant 0 : index
    %10 = vector.load %arg6[%c0_8, %c0_9] : memref<8x128xf32, #tpu.memory_space<vmem>>, vector<8x128xf32>
    %11 = vector.shape_cast %4 : vector<16x128xf32> to vector<2x8x128xf32>
    %cst_10 = arith.constant dense<0.000000e+00> : vector<8x128xf32>
    %12 = vector.multi_reduction <add>, %11, %cst_10 [0] : vector<2x8x128xf32> to vector<8x128xf32>
    %13 = arith.addf %10, %12 : vector<8x128xf32>
    %c0_11 = arith.constant 0 : index
    %c0_12 = arith.constant 0 : index
    %14 = vector.load %arg6[%c0_11, %c0_12] : memref<8x128xf32, #tpu.memory_space<vmem>>, vector<8x128xf32>
    tpu.vector_store %arg6[%c0_11, %c0_12], %13 {strides = array<i32>} : memref<8x128xf32, #tpu.memory_space<vmem>>, vector<8x128xf32>,
    %c0_i32_13 = arith.constant 0 : i32
    %15 = arith.cmpi eq, %arg0, %c0_i32_13 : i32
    %16 = arith.extui %15 : i1 to i32
    %c0_i32_14 = arith.constant 0 : i32
    %17 = arith.cmpi ne, %16, %c0_i32_14 : i32
    scf.if %17 {
      %c0_15 = arith.constant 0 : index
      %c0_16 = arith.constant 0 : index
      %18 = vector.load %arg5[%c0_15, %c0_16] : memref<8x128xf32, #tpu.memory_space<vmem>>, vector<8x128xf32>
      %cst_17 = arith.constant dense<0.000000e+00> : vector<128xf32>
      %19 = vector.multi_reduction <add>, %18, %cst_17 [0] : vector<8x128xf32> to vector<128xf32>
      %20 = vector.shape_cast %19 : vector<128xf32> to vector<1x128xf32>
      %cst_18 = arith.constant dense<0.000000e+00> : vector<1xf32>
      %21 = vector.multi_reduction <add>, %20, %cst_18 [1] : vector<1x128xf32> to vector<1xf32>
      %22 = vector.shape_cast %21 : vector<1xf32> to vector<1x1xf32>
      %c0_19 = arith.constant 0 : index
      %c0_20 = arith.constant 0 : index
      %23 = vector.load %arg6[%c0_19, %c0_20] : memref<8x128xf32, #tpu.memory_space<vmem>>, vector<8x128xf32>
      %cst_21 = arith.constant dense<0.000000e+00> : vector<128xf32>
      %24 = vector.multi_reduction <add>, %23, %cst_21 [0] : vector<8x128xf32> to vector<128xf32>
      %25 = vector.shape_cast %24 : vector<128xf32> to vector<1x128xf32>
      %cst_22 = arith.constant dense<0.000000e+00> : vector<1xf32>
      %26 = vector.multi_reduction <add>, %25, %cst_22 [1] : vector<1x128xf32> to vector<1xf32>
      %27 = vector.shape_cast %26 : vector<1xf32> to vector<1x1xf32>
      %c0_23 = arith.constant 0 : index
      %28 = memref.load %arg1[%c0_23] : memref<2xf32, #tpu.memory_space<smem>>
      %cst_24 = arith.constant 4.8828125E-4 : f32
      %29 = vector.broadcast %cst_24 : f32 to vector<1x1xf32>
      %30 = arith.mulf %22, %29 : vector<1x1xf32>
      %31 = vector.broadcast %28 : f32 to vector<1x1xf32>
      %32 = arith.addf %31, %30 : vector<1x1xf32>
      %cst_25 = arith.constant 4.8828125E-4 : f32
      %33 = vector.broadcast %cst_25 : f32 to vector<1x1xf32>
      %34 = arith.mulf %27, %33 : vector<1x1xf32>
      %35 = arith.subf %32, %34 : vector<1x1xf32>
      %36 = arith.negf %35 : vector<1x1xf32>
      %37 = math.exp %36 : vector<1x1xf32>
      %cst_26 = arith.constant 1.000000e+00 : f32
      %38 = vector.broadcast %cst_26 : f32 to vector<1x1xf32>
      %39 = arith.addf %38, %37 : vector<1x1xf32>
      %40 = arith.divf %38, %39 : vector<1x1xf32>
      %c1 = arith.constant 1 : index
      %41 = memref.load %arg1[%c1] : memref<2xf32, #tpu.memory_space<smem>>
      %42 = vector.broadcast %41 : f32 to vector<1x1xf32>
      %43 = arith.cmpf olt, %42, %40 : vector<1x1xf32>
      %44 = arith.extui %43 : vector<1x1xi1> to vector<1x1xi32>
      %45 = arith.sitofp %44 : vector<1x1xi32> to vector<1x1xf32>
      %c0_27 = arith.constant 0 : index
      %c0_28 = arith.constant 0 : index
      %46 = vector.load %arg4[%c0_27, %c0_28] : memref<1x1xf32, #tpu.memory_space<vmem>>, vector<1x1xf32>
      tpu.vector_store %arg4[%c0_27, %c0_28], %45 {strides = array<i32>} : memref<1x1xf32, #tpu.memory_space<vmem>>, vector<1x1xf32>,
    } else {
    }
    return
  }
  func.func @transform_0(%arg0: i32) -> i32 {
    %c0_i32 = arith.constant 0 : i32
    %c0_i32_0 = arith.constant 0 : i32
    return %c0_i32 : i32
  }
  func.func @transform_1(%arg0: i32) -> (i32, i32) {
    %c0_i32 = arith.constant 0 : i32
    %0 = arith.minsi %arg0, %c0_i32 : i32
    %c0_i32_0 = arith.constant 0 : i32
    %c0_i32_1 = arith.constant 0 : i32
    return %0, %c0_i32_0 : i32, i32
  }
  func.func @transform_2(%arg0: i32) -> (i32, i32) {
    %c0_i32 = arith.constant 0 : i32
    %0 = arith.minsi %arg0, %c0_i32 : i32
    %c0_i32_0 = arith.constant 0 : i32
    %c0_i32_1 = arith.constant 0 : i32
    return %0, %c0_i32_0 : i32, i32
  }
  func.func @transform_3(%arg0: i32) -> (i32, i32) {
    %c0_i32 = arith.constant 0 : i32
    %c0_i32_0 = arith.constant 0 : i32
    %c0_i32_1 = arith.constant 0 : i32
    return %c0_i32, %c0_i32_0 : i32, i32
  }
}

</mosaic_0001>

<llo_original>
// kernel: tpu_custom_call.1
$region0: #{tpu_custom_call.1}
  #allocation0 [shape = 'u32[]', space=smem, size = 0x4, offset = 0x4, fixed_abs, tag = 'smem constant byte address 0x4 - core index']
  #allocation1 [shape = 'u32[144,128]{1,0:T(1,128)}', space=vmem, size = 0x12000, scoped, tag = 'internal scratch']
  #allocation2 [shape = 'f32[8,128]{1,0:T(8,128)}', space=vmem, size = 0x1000, scoped, tag = 'scratch operand']
  #allocation3 [shape = 'f32[8,128]{1,0:T(8,128)}', space=vmem, size = 0x1000, scoped, tag = 'scratch operand']
  %s0 = inlined_call_operand.hbm [shape: f32[2], index: 0, kind: input, shape index: {}]
  %s1 = inlined_call_operand.hbm [shape: f32[16,128], index: 1, kind: input, shape index: {}]
  %s2 = inlined_call_operand.hbm [shape: f32[16,128], index: 2, kind: input, shape index: {}]
  %s3 = inlined_call_operand.hbm [shape: f32[1,1], index: 3, kind: output, shape index: {}]
  %s4 = sld [smem:[#allocation0]]
  $region42: #{tpu_custom_call.1} parent=0
    _
  %s6 = ssub.s32 1, %s4
  %s7 = scalar_select 0, %s6, %s4
  $region1: #{tpu_custom_call.1} parent=0
    #allocation4 [shape = 'u8[512]{0}', space=smem, size = 0x200, scoped, tag = 'input window, operand 0, single buffered']
    #allocation5 [shape = 's32[1]{0}', space=sflag, size = 0x4, scoped, tag = 'scoped memory for tpu_custom_call.1']
    #allocation6 [shape = 's32[1]{0}', space=sflag, size = 0x4, scoped, tag = 'scoped memory for tpu_custom_call.1']
    #allocation7 [shape = 's32[1]{0}', space=sflag, size = 0x4, scoped, tag = 'scoped memory for tpu_custom_call.1']
    #allocation8 [shape = 'u8[8192]{0}', space=vmem, size = 0x2000, scoped, tag = 'input window, operand 1, single buffered']
    #allocation9 [shape = 'u8[8192]{0}', space=vmem, size = 0x2000, scoped, tag = 'input window, operand 2, single buffered']
    #allocation10 [shape = 's32[1]{0}', space=sflag, size = 0x4, scoped, tag = 'scoped memory for tpu_custom_call.1']
    #allocation11 [shape = 'u8[512]{0}', space=vmem, size = 0x400, scoped, tag = 'output window, operand 0, single buffered']
    %8 = vsyncpa [#allocation7], 0
    %9 = vsyncpa [#allocation5], 0
    %10 = vsyncpa [#allocation10], 0
    %11 = vsyncpa [#allocation6], 0
    // Predicated region
    $region2: #{tpu_custom_call.1} parent=1 // pred_check
      _
    $region3: #{tpu_custom_call.1} parent=1 // pred_check_branch
      %13 = sbr.rel (0) target = $region5
    $region4: #{tpu_custom_call.1} parent=1 // pred_region
      %s15 = ssub.s32 16, 16
      %16 = vsyncadd [#allocation7], %s15
      %19 = dma.hbm_to_smem %s0, 16, [#allocation4], [#allocation7]
    $region5: #{tpu_custom_call.1} parent=1 // pred_fallthru
      _
    // Predicated region
    $region6: #{tpu_custom_call.1} parent=1 // pred_check
      _
    $region7: #{tpu_custom_call.1} parent=1 // pred_check_branch
      %21 = sbr.rel (0) target = $region9
    $region8: #{tpu_custom_call.1} parent=1 // pred_region
      %s23 = ssub.s32 256, 256
      %24 = vsyncadd [#allocation5], %s23
      %s25 = sshll.u32 [#allocation8], 4
      %s26 = int_to_ptr.vmem [resolvable:$true] %s25
      %31 = dma.hbm_to_vmem [thread:$0]  %s1, 256, %s26, [#allocation5], 128, 128, 8
    $region9: #{tpu_custom_call.1} parent=1 // pred_fallthru
      _
    // Predicated region
    $region10: #{tpu_custom_call.1} parent=1 // pred_check
      _
    $region11: #{tpu_custom_call.1} parent=1 // pred_check_branch
      %33 = sbr.rel (0) target = $region13
    $region12: #{tpu_custom_call.1} parent=1 // pred_region
      %s35 = ssub.s32 256, 256
      %36 = vsyncadd [#allocation10], %s35
      %s37 = sshll.u32 [#allocation9], 4
      %s38 = int_to_ptr.vmem [resolvable:$true] %s37
      %43 = dma.hbm_to_vmem [thread:$0]  %s2, 256, %s38, [#allocation10], 128, 128, 8
    $region13: #{tpu_custom_call.1} parent=1 // pred_fallthru
      _
    // Predicated region
    $region14: #{tpu_custom_call.1} parent=1 // pred_check
      _
    $region15: #{tpu_custom_call.1} parent=1 // pred_check_branch
      %45 = sbr.rel (0) target = $region17
    $region16: #{tpu_custom_call.1} parent=1 // pred_region
      %46 = dma.done [#allocation7], 16
    $region17: #{tpu_custom_call.1} parent=1 // pred_fallthru
      _
    // Predicated region
    $region18: #{tpu_custom_call.1} parent=1 // pred_check
      _
    $region19: #{tpu_custom_call.1} parent=1 // pred_check_branch
      %48 = sbr.rel (0) target = $region21
    $region20: #{tpu_custom_call.1} parent=1 // pred_region
      %49 = dma.done [#allocation5], 256
    $region21: #{tpu_custom_call.1} parent=1 // pred_fallthru
      _
    // Predicated region
    $region22: #{tpu_custom_call.1} parent=1 // pred_check
      _
    $region23: #{tpu_custom_call.1} parent=1 // pred_check_branch
      %51 = sbr.rel (0) target = $region25
    $region24: #{tpu_custom_call.1} parent=1 // pred_region
      %52 = dma.done [#allocation10], 256
    $region25: #{tpu_custom_call.1} parent=1 // pred_fallthru
      _
    %53 = sfence
    %p54 = scmp.eq.s32.totalorder 0, 0
    // Predicated region
    $region26: #{tpu_custom_call.1} parent=1 // pred_check
      %p55 = pneg %p54
    $region27: #{tpu_custom_call.1} parent=1 // pred_check_branch
      %57 = sbr.rel (%p55) target = $region29
    $region28: #{tpu_custom_call.1} parent=1 // pred_region
      %58 = vst [vmem:[#allocation2] sm:$0xff] 0.0
      %59 = vst [vmem:[#allocation3] sm:$0xff] 0.0
    $region29: #{tpu_custom_call.1} parent=1 // pred_fallthru
      _
    %v60 = vld [vmem:[#allocation8] sm:$0xff]
    %v61 = vld [vmem:[#allocation8 + $0x8] sm:$0xff]
    %v62 = vld [vmem:[#allocation9] sm:$0xff]
    %v63 = vld [vmem:[#allocation9 + $0x8] sm:$0xff]
    %v64 = vld [vmem:[#allocation2] sm:$0xff]
    %v65 = vadd.f32 %v60, %v61
    %v66 = vadd.f32 %v64, %v65
    %67 = vst [vmem:[#allocation2] sm:$0xff] %v66
    %v68 = vld [vmem:[#allocation3] sm:$0xff]
    %v69 = vadd.f32 %v62, %v63
    %v70 = vadd.f32 %v68, %v69
    %71 = vst [vmem:[#allocation3] sm:$0xff] %v70
    // Predicated region
    $region30: #{tpu_custom_call.1} parent=1 // pred_check
      %p72 = pneg %p54
    $region31: #{tpu_custom_call.1} parent=1 // pred_check_branch
      %74 = sbr.rel (%p72) target = $region33
    $region32: #{tpu_custom_call.1} parent=1 // pred_region
      %v75 = vld [vmem:[#allocation2] sm:$0xff]
      %v76 = vrot.slane %v75, 4
      %v77 = vadd.f32 %v75, %v76
      %v78 = vrot.slane %v77, 2
      %v79 = vadd.f32 %v77, %v78
      %v80 = vrot.slane %v79, 1
      %v81 = vadd.f32 %v79, %v80
      %82 = vadd.xlane.f32.xlu0 %v81
      %v83 = vpop.xlane.xlu0 %82
      %v84 = vld [vmem:[#allocation3] sm:$0xff]
      %v85 = vrot.slane %v84, 4
      %v86 = vadd.f32 %v84, %v85
      %v87 = vrot.slane %v86, 2
      %v88 = vadd.f32 %v86, %v87
      %v89 = vrot.slane %v88, 1
      %v90 = vadd.f32 %v88, %v89
      %91 = vadd.xlane.f32.xlu0 %v90
      %v92 = vpop.xlane.xlu0 %91
      %s93 = sld [smem:[#allocation4]]
      %v94 = vmul.f32 %v83, 0.00048828125
      %v95 = vstv %s93
      %v96 = vadd.f32 %v95, %v94
      %v97 = vmul.f32 %v92, 0.00048828125
      %v98 = vsub.f32 %v96, %v97
      %v99 = vxor.u32 %v98, 2147483648
      %v100 = vmul.f32 %v99, 1.442695
      %v101 = vpow.pop %v100
      %v102 = vadd.f32 %v101, 1.0
      %v103 = vrcp.pop %v102
      %v104 = vmul.f32 1.0, %v103
      %s105 = sld [smem:[#allocation4 + $0x1]]
      %v106 = vstv %s105
      %vm107 = vcmp.lt.f32.partialorder %v106, %v104
      %v108 = vsel %vm107, 1, 0
      %v109 = vcvt.s32.f32 %v108
      %vm110 = vcmask 0
      %111 = vst.msk [vmem:[#allocation11] sm:$0x1] %vm110, %v109
    $region33: #{tpu_custom_call.1} parent=1 // pred_fallthru
      _
    // Predicated region
    $region34: #{tpu_custom_call.1} parent=1 // pred_check
      _
    $region35: #{tpu_custom_call.1} parent=1 // pred_check_branch
      %113 = sbr.rel (0) target = $region37
    $region36: #{tpu_custom_call.1} parent=1 // pred_region
      %s115 = ssub.s32 16, 16
      %116 = vsyncadd [#allocation6], %s115
      %s118 = sshll.u32 [#allocation11], 4
      %s119 = int_to_ptr.vmem [resolvable:$true] %s118
      %121 = dma.vmem_to_hbm [thread:$0]  %s119, 16, %s3, [#allocation6]
    $region37: #{tpu_custom_call.1} parent=1 // pred_fallthru
      _
    // Predicated region
    $region38: #{tpu_custom_call.1} parent=1 // pred_check
      _
    $region39: #{tpu_custom_call.1} parent=1 // pred_check_branch
      %123 = sbr.rel (0) target = $region41
    $region40: #{tpu_custom_call.1} parent=1 // pred_region
      %124 = dma.done [#allocation6], 16
    $region41: #{tpu_custom_call.1} parent=1 // pred_fallthru
      _
    %125 = vsyncpa [#allocation5], 1
    %126 = vsyncpa [#allocation10], 1
    %127 = vsyncpa [#allocation6], 1
    %128 = vsyncpa [#allocation7], 1

</llo_original>
